<compile_context>
chip_gen: v5e
topology: v5e:2x2
jax: 0.10.0
libtpu: 0.0.40
codegen_flags: <defaults>
</compile_context>

<pallas_src>
import jax
import jax.numpy as jnp
from jax.experimental import pallas as pl
from jax.experimental.pallas import tpu as pltpu

PATCH = 16             # forward uses x.shape[2]//16, x.shape[3]//16
EMBED_DIM = 32         # backbone embedding dim C (stand-in)
N_OUT = 8              # linear3 output width
OUT_PAD = 128          # lane-dense padded output width (true outputs = N_OUT)
ROW_TILE_TARGET = 256  # multiple of the MXU edge (128 on v5e, 256 on v6e/v7x)


def _round_up(x, m):
    return ((x + m - 1) // m) * m


def _hidden_chunk_target():
    """Hidden-dim (4N) streaming chunk; roughly halved on v7x (64 MiB VMEM)."""
    try:
        info = pltpu.get_tpu_info()
        vmem_bytes = getattr(info, "vmem_capacity_bytes", 64 * 1024 * 1024)
    except Exception:  # be conservative if the query is unavailable
        vmem_bytes = 64 * 1024 * 1024
    return 512 if vmem_bytes >= 100 * 1024 * 1024 else 256


# ----------------------------------------------------------------------------
# Pallas kernel: fused  linear1 -> GELU(erf) -> linear2 (+acc) -> linear3
# grid = (row tiles [parallel], hidden-dim chunks [arbitrary / reduction])
# ----------------------------------------------------------------------------
def mixer_head_kernel(x_ref, w1_ref, b1_ref, w2_ref, b2_ref, w3_ref, b3_ref,
                      o_ref, acc_ref):
    k = pl.program_id(1)

    @pl.when(k == 0)
    def _init():
        acc_ref[...] = jnp.zeros_like(acc_ref)

    # linear1 chunk: (tm, N) @ (N, tk) -> (tm, tk); bf16 MXU, f32 accumulate.
    h = jnp.dot(x_ref[...], w1_ref[...], preferred_element_type=jnp.float32)
    h = h + b1_ref[...]                                    # f32 bias

    # exact erf-based GELU (matches torch.nn.GELU() default), kept in f32.
    h = 0.5 * h * (1.0 + jax.lax.erf(h * jnp.float32(0.7071067811865476)))

    # linear2 chunk: (tm, tk) @ (tk, N), accumulated into f32 VMEM scratch.
    acc_ref[...] += jnp.dot(h.astype(w2_ref.dtype), w2_ref[...],
                            preferred_element_type=jnp.float32)

    @pl.when(k == pl.num_programs(1) - 1)
    def _finalize():
        y = acc_ref[...] + b2_ref[...]                     # f32 bias
        # linear3 against the 128-lane zero-padded W3 -> lane-dense store.
        o = jnp.dot(y.astype(w3_ref.dtype), w3_ref[...],
                    preferred_element_type=jnp.float32)
        o_ref[...] = (o + b3_ref[...]).astype(o_ref.dtype)


def mixer_head_mlp(x_rows, w1, b1, w2, b2, w3, b3):
    """x_rows: (rows, N) -> (rows, 8); fused Pallas MLP head."""
    rows, N = x_rows.shape
    hid = w1.shape[1]          # 4N
    n_out = w3.shape[1]        # 8

    # ---- tile plan --------------------------------------------------------
    rows8 = _round_up(rows, 8)
    row_tile = rows8 if rows8 <= ROW_TILE_TARGET else ROW_TILE_TARGET
    rows_pad = _round_up(rows, row_tile)

    tk_target = _hidden_chunk_target()
    tk = hid if hid <= tk_target else tk_target            # multiple of 128
    hid_pad = _round_up(hid, tk)

    # ---- dtype / padding prep (cheap; hoist out of the hot path in prod) --
    xb = x_rows.astype(jnp.bfloat16)
    if rows_pad != rows:
        xb = jnp.pad(xb, ((0, rows_pad - rows), (0, 0)))
    w1b = w1.astype(jnp.bfloat16)
    w2b = w2.astype(jnp.bfloat16)
    b1f = b1.astype(jnp.float32).reshape(1, hid)
    b2f = b2.astype(jnp.float32).reshape(1, N)
    if hid_pad != hid:
        w1b = jnp.pad(w1b, ((0, 0), (0, hid_pad - hid)))
        b1f = jnp.pad(b1f, ((0, 0), (0, hid_pad - hid)))
        w2b = jnp.pad(w2b, ((0, hid_pad - hid), (0, 0)))
    # zero-pad linear3 to 128 output lanes (padded columns stay exactly 0).
    w3b = jnp.zeros((N, OUT_PAD), jnp.bfloat16).at[:, :n_out].set(
        w3.astype(jnp.bfloat16))
    b3f = jnp.zeros((1, OUT_PAD), jnp.float32).at[:, :n_out].set(
        b3.astype(jnp.float32).reshape(1, n_out))

    grid = (rows_pad // row_tile, hid_pad // tk)

    # ---- VMEM budget: double-buffered pipeline bufs + f32 accumulator -----
    buf_bytes = (row_tile * N * 2            # x tile (bf16)
                 + N * tk * 2                # W1 chunk (bf16)
                 + tk * 4                    # b1 chunk (f32)
                 + tk * N * 2                # W2 chunk (bf16)
                 + N * 4                     # b2 (f32)
                 + N * OUT_PAD * 2           # W3 padded (bf16)
                 + OUT_PAD * 4               # b3 padded (f32)
                 + row_tile * OUT_PAD * 4)   # out tile (f32)
    needed = 2 * buf_bytes + row_tile * N * 4
    vmem_limit = min(max(int(needed * 1.5) + (4 << 20), 32 << 20), 60 << 20)

    flops = 2 * rows_pad * (N * hid_pad + hid_pad * N + N * OUT_PAD)
    cost = pl.CostEstimate(
        flops=flops,
        transcendentals=rows_pad * hid_pad,
        bytes_accessed=(xb.size * 2 + w1b.size * 2 + w2b.size * 2
                        + w3b.size * 2 + b1f.size * 4 + b2f.size * 4
                        + b3f.size * 4 + rows_pad * OUT_PAD * 4))

    out_padded = pl.pallas_call(
        mixer_head_kernel,
        out_shape=jax.ShapeDtypeStruct((rows_pad, OUT_PAD), jnp.float32),
        grid_spec=pltpu.PrefetchScalarGridSpec(
            num_scalar_prefetch=0,
            grid=grid,
            in_specs=[
                pl.BlockSpec((row_tile, N), lambda i, k: (i, 0)),   # x tile
                pl.BlockSpec((N, tk), lambda i, k: (0, k)),         # W1 chunk
                pl.BlockSpec((1, tk), lambda i, k: (0, k)),         # b1 chunk
                pl.BlockSpec((tk, N), lambda i, k: (k, 0)),         # W2 chunk
                pl.BlockSpec((1, N), lambda i, k: (0, 0)),          # b2
                pl.BlockSpec((N, OUT_PAD), lambda i, k: (0, 0)),    # W3 pad
                pl.BlockSpec((1, OUT_PAD), lambda i, k: (0, 0)),    # b3 pad
            ],
            out_specs=pl.BlockSpec((row_tile, OUT_PAD), lambda i, k: (i, 0)),
            scratch_shapes=[pltpu.VMEM((row_tile, N), jnp.float32)],
        ),
        compiler_params=pltpu.CompilerParams(
            dimension_semantics=("parallel", "arbitrary"),
            vmem_limit_bytes=vmem_limit),
        cost_estimate=cost,
    )(xb, w1b, b1f, w2b, b2f, w3b, b3f)

    return out_padded[:rows, :n_out]


# ----------------------------------------------------------------------------
# Backbone stand-in (plain JAX glue).
# TODO(synk): the real `self.backbone` is an external SAM/ViT model passed
# into __init__ and not reproducible here; a deterministic linear patch-embed
# producing tokens stands in for it.
# ----------------------------------------------------------------------------
def patch_embed_transposed(x_nchw, w_pe, b_pe):
    """Stand-in backbone; emits tokens already transposed to (B, C, N) so the
    wrapper never materializes a separate (B, N, C) tensor + swapaxes pass."""
    B, Cin, Himg, Wimg = x_nchw.shape
    H, W = Himg // PATCH, Wimg // PATCH
    x = x_nchw.reshape(B, Cin, H, PATCH, W, PATCH)
    x = jnp.transpose(x, (0, 2, 4, 1, 3, 5))
    x = x.reshape(B, H * W, Cin * PATCH * PATCH)              # (B, N, K)
    return jnp.einsum("bnk,kc->bcn", x, w_pe) + b_pe[None, :, None]


def mixer_head_branch_forward(x_nchw, params):
    """Full MixerHead_Branch.forward: image (B,Cin,Himg,Wimg) -> (B, 8*C)."""
    x_bcn = patch_embed_transposed(x_nchw, params["w_pe"], params["b_pe"])
    B, C, N = x_bcn.shape
    x_rows = x_bcn.reshape(B * C, N)                          # rows = B*C

    out_rows = mixer_head_mlp(
        x_rows,
        params["w1"], params["b1"],
        params["w2"], params["b2"],
        params["w3"], params["b3"],
    )                                                         # (B*C, 8)

    out = jnp.swapaxes(out_rows.reshape(B, C, N_OUT), -1, -2)  # (B, 8, C)
    return out.reshape(B, N_OUT * C)                           # flatten(-2,-1)


def _reference_forward(x_nchw, params):
    """Pure-JAX reference using the same bf16-in / f32-accumulate numerics."""
    x_bcn = patch_embed_transposed(x_nchw, params["w_pe"], params["b_pe"])
    B, C, N = x_bcn.shape
    x = x_bcn.reshape(B * C, N).astype(jnp.bfloat16)
    h = jnp.dot(x, params["w1"].astype(jnp.bfloat16),
                preferred_element_type=jnp.float32)
    h = h + params["b1"].astype(jnp.float32).reshape(1, -1)
    h = 0.5 * h * (1.0 + jax.lax.erf(h * jnp.float32(0.7071067811865476)))
    y = jnp.dot(h.astype(jnp.bfloat16), params["w2"].astype(jnp.bfloat16),
                preferred_element_type=jnp.float32)
    y = y + params["b2"].astype(jnp.float32).reshape(1, -1)
    o = jnp.dot(y.astype(jnp.bfloat16), params["w3"].astype(jnp.bfloat16),
                preferred_element_type=jnp.float32)
    o = o + params["b3"].astype(jnp.float32).reshape(1, -1)
    out = jnp.swapaxes(o.reshape(B, C, N_OUT), -1, -2)
    return out.reshape(B, N_OUT * C)


def init_params(key, n_tokens, embed_dim, in_chans):
    ks = jax.random.split(key, 8)
    scale = 0.02
    N, C = n_tokens, embed_dim
    f32 = jnp.float32
    return {
        # backbone stand-in (patch embed)
        "w_pe": scale * jax.random.normal(ks[0], (in_chans * PATCH * PATCH, C), f32),
        "b_pe": scale * jax.random.normal(ks[1], (C,), f32),
        # head MLP: weights stored (in, out) in bf16 (halves weight DMA, MXU
        # native); biases kept in f32 and added in f32 inside the kernel.
        "w1": (scale * jax.random.normal(ks[2], (N, 4 * N), f32)).astype(jnp.bfloat16),
        "b1": scale * jax.random.normal(ks[3], (1, 4 * N), f32),
        "w2": (scale * jax.random.normal(ks[4], (4 * N, N), f32)).astype(jnp.bfloat16),
        "b2": scale * jax.random.normal(ks[5], (1, N), f32),
        "w3": (scale * jax.random.normal(ks[6], (N, N_OUT), f32)).astype(jnp.bfloat16),
        "b3": scale * jax.random.normal(ks[7], (1, N_OUT), f32),
    }


if __name__ == "__main__":
    key = jax.random.PRNGKey(0)
    k_x, k_p = jax.random.split(key)

    B, Cin, Himg, Wimg = 2, 3, 64, 64            # small image; N = (64/16)^2 = 16
    n_tokens = (Himg // PATCH) * (Wimg // PATCH)

    x = jax.random.normal(k_x, (B, Cin, Himg, Wimg), jnp.float32)
    params = init_params(k_p, n_tokens, EMBED_DIM, Cin)

    fwd = jax.jit(mixer_head_branch_forward)
    out = jax.block_until_ready(fwd(x, params))

    assert out.shape == (B, N_OUT * EMBED_DIM), out.shape
    assert bool(jnp.all(jnp.isfinite(out)))

    ref = jax.block_until_ready(jax.jit(_reference_forward)(x, params))
    assert bool(jnp.allclose(out, ref, rtol=2e-2, atol=1e-4)), (
        float(jnp.max(jnp.abs(out - ref))))

    print("KERNEL_OK")
</pallas_src>

<mosaic_0001>
module attributes {stable_mosaic.version = 11 : i64} {
  func.func @mixer_head_kernel(%arg0: i32, %arg1: i32, %arg2: memref<64x16xbf16, #tpu.memory_space<vmem>>, %arg3: memref<16x64xbf16, #tpu.memory_space<vmem>>, %arg4: memref<1x64xf32, #tpu.memory_space<vmem>>, %arg5: memref<64x16xbf16, #tpu.memory_space<vmem>>, %arg6: memref<1x16xf32, #tpu.memory_space<vmem>>, %arg7: memref<16x128xbf16, #tpu.memory_space<vmem>>, %arg8: memref<1x128xf32, #tpu.memory_space<vmem>>, %arg9: memref<64x128xf32, #tpu.memory_space<vmem>>, %arg10: memref<64x16xf32, #tpu.memory_space<vmem>>) attributes {dimension_semantics = [#tpu.dimension_semantics<parallel>, #tpu.dimension_semantics<arbitrary>], iteration_bounds = array<i64: 1, 1>, scalar_prefetch = 0 : i64, scratch_operands = 1 : i64, tpu.core_type = #tpu.core_type<tc>, window_params = [{transform_indices = @transform_0, window_bounds = array<i64: 64, 16>}, {transform_indices = @transform_1, window_bounds = array<i64: 16, 64>}, {transform_indices = @transform_2, window_bounds = array<i64: 1, 64>}, {transform_indices = @transform_3, window_bounds = array<i64: 64, 16>}, {pipeline_mode = #tpu.pipeline_mode<synchronous>, transform_indices = @transform_4, window_bounds = array<i64: 1, 16>}, {pipeline_mode = #tpu.pipeline_mode<synchronous>, transform_indices = @transform_5, window_bounds = array<i64: 16, 128>}, {pipeline_mode = #tpu.pipeline_mode<synchronous>, transform_indices = @transform_6, window_bounds = array<i64: 1, 128>}, {transform_indices = @transform_7, window_bounds = array<i64: 64, 128>}]} {
    %c0_i32 = arith.constant 0 : i32
    %0 = arith.cmpi eq, %arg1, %c0_i32 : i32
    %1 = arith.extui %0 : i1 to i32
    %c0_i32_0 = arith.constant 0 : i32
    %2 = arith.cmpi ne, %1, %c0_i32_0 : i32
    scf.if %2 {
      %cst_18 = arith.constant 0.000000e+00 : f32
      %26 = vector.broadcast %cst_18 : f32 to vector<64x16xf32>
      %c0_19 = arith.constant 0 : index
      %c0_20 = arith.constant 0 : index
      %27 = vector.load %arg10[%c0_19, %c0_20] : memref<64x16xf32, #tpu.memory_space<vmem>>, vector<64x16xf32>
      tpu.vector_store %arg10[%c0_19, %c0_20], %26 {strides = array<i32>} : memref<64x16xf32, #tpu.memory_space<vmem>>, vector<64x16xf32>,
    } else {
    }
    %c0 = arith.constant 0 : index
    %c0_1 = arith.constant 0 : index
    %3 = vector.load %arg2[%c0, %c0_1] : memref<64x16xbf16, #tpu.memory_space<vmem>>, vector<64x16xbf16>
    %c0_2 = arith.constant 0 : index
    %c0_3 = arith.constant 0 : index
    %4 = vector.load %arg3[%c0_2, %c0_3] : memref<16x64xbf16, #tpu.memory_space<vmem>>, vector<16x64xbf16>
    %cst = arith.constant dense<0.000000e+00> : vector<64x64xf32>
    %5 = tpu.matmul %3, %4, %cst {dimension_numbers = #tpu.dot_dimension_numbers<[1], [0], [0], [1], [0, 0, 1, 1], [], []>} : vector<64x16xbf16>, vector<16x64xbf16>, vector<64x64xf32> -> vector<64x64xf32>
    %c0_4 = arith.constant 0 : index
    %c0_5 = arith.constant 0 : index
    %6 = vector.load %arg4[%c0_4, %c0_5] : memref<1x64xf32, #tpu.memory_space<vmem>>, vector<1x64xf32>
    %7 = vector.broadcast %6 : vector<1x64xf32> to vector<64x64xf32>
    %8 = arith.addf %5, %7 : vector<64x64xf32>
    %cst_6 = arith.constant 5.000000e-01 : f32
    %9 = vector.broadcast %cst_6 : f32 to vector<64x64xf32>
    %10 = arith.mulf %9, %8 : vector<64x64xf32>
    %cst_7 = arith.constant 0.707106769 : f32
    %11 = vector.broadcast %cst_7 : f32 to vector<64x64xf32>
    %12 = arith.mulf %8, %11 : vector<64x64xf32>
    %13 = math.erf %12 : vector<64x64xf32>
    %cst_8 = arith.constant 1.000000e+00 : f32
    %14 = vector.broadcast %cst_8 : f32 to vector<64x64xf32>
    %15 = arith.addf %14, %13 : vector<64x64xf32>
    %16 = arith.mulf %10, %15 : vector<64x64xf32>
    %c0_9 = arith.constant 0 : index
    %c0_10 = arith.constant 0 : index
    %17 = vector.load %arg10[%c0_9, %c0_10] : memref<64x16xf32, #tpu.memory_space<vmem>>, vector<64x16xf32>
    %18 = arith.truncf %16 : vector<64x64xf32> to vector<64x64xbf16>
    %c0_11 = arith.constant 0 : index
    %c0_12 = arith.constant 0 : index
    %19 = vector.load %arg5[%c0_11, %c0_12] : memref<64x16xbf16, #tpu.memory_space<vmem>>, vector<64x16xbf16>
    %cst_13 = arith.constant dense<0.000000e+00> : vector<64x16xf32>
    %20 = tpu.matmul %18, %19, %cst_13 {dimension_numbers = #tpu.dot_dimension_numbers<[1], [0], [0], [1], [0, 0, 1, 1], [], []>} : vector<64x64xbf16>, vector<64x16xbf16>, vector<64x16xf32> -> vector<64x16xf32>
    %21 = arith.addf %17, %20 : vector<64x16xf32>
    %c0_14 = arith.constant 0 : index
    %c0_15 = arith.constant 0 : index
    %22 = vector.load %arg10[%c0_14, %c0_15] : memref<64x16xf32, #tpu.memory_space<vmem>>, vector<64x16xf32>
    tpu.vector_store %arg10[%c0_14, %c0_15], %21 {strides = array<i32>} : memref<64x16xf32, #tpu.memory_space<vmem>>, vector<64x16xf32>,
    %c0_i32_16 = arith.constant 0 : i32
    %23 = arith.cmpi eq, %arg1, %c0_i32_16 : i32
    %24 = arith.extui %23 : i1 to i32
    %c0_i32_17 = arith.constant 0 : i32
    %25 = arith.cmpi ne, %24, %c0_i32_17 : i32
    scf.if %25 {
      %c0_18 = arith.constant 0 : index
      %c0_19 = arith.constant 0 : index
      %26 = vector.load %arg10[%c0_18, %c0_19] : memref<64x16xf32, #tpu.memory_space<vmem>>, vector<64x16xf32>
      %c0_20 = arith.constant 0 : index
      %c0_21 = arith.constant 0 : index
      %27 = vector.load %arg6[%c0_20, %c0_21] : memref<1x16xf32, #tpu.memory_space<vmem>>, vector<1x16xf32>
      %28 = vector.broadcast %27 : vector<1x16xf32> to vector<64x16xf32>
      %29 = arith.addf %26, %28 : vector<64x16xf32>
      %30 = arith.truncf %29 : vector<64x16xf32> to vector<64x16xbf16>
      %c0_22 = arith.constant 0 : index
      %c0_23 = arith.constant 0 : index
      %31 = vector.load %arg7[%c0_22, %c0_23] : memref<16x128xbf16, #tpu.memory_space<vmem>>, vector<16x128xbf16>
      %cst_24 = arith.constant dense<0.000000e+00> : vector<64x128xf32>
      %32 = tpu.matmul %30, %31, %cst_24 {dimension_numbers = #tpu.dot_dimension_numbers<[1], [0], [0], [1], [0, 0, 1, 1], [], []>} : vector<64x16xbf16>, vector<16x128xbf16>, vector<64x128xf32> -> vector<64x128xf32>
      %c0_25 = arith.constant 0 : index
      %c0_26 = arith.constant 0 : index
      %33 = vector.load %arg8[%c0_25, %c0_26] : memref<1x128xf32, #tpu.memory_space<vmem>>, vector<1x128xf32>
      %34 = vector.broadcast %33 : vector<1x128xf32> to vector<64x128xf32>
      %35 = arith.addf %32, %34 : vector<64x128xf32>
      %c0_27 = arith.constant 0 : index
      %c0_28 = arith.constant 0 : index
      %36 = vector.load %arg9[%c0_27, %c0_28] : memref<64x128xf32, #tpu.memory_space<vmem>>, vector<64x128xf32>
      tpu.vector_store %arg9[%c0_27, %c0_28], %35 {strides = array<i32>} : memref<64x128xf32, #tpu.memory_space<vmem>>, vector<64x128xf32>,
    } else {
    }
    return
  }
  func.func @transform_0(%arg0: i32, %arg1: i32) -> (i32, i32) {
    %c0_i32 = arith.constant 0 : i32
    %c0_i32_0 = arith.constant 0 : i32
    return %arg0, %c0_i32 : i32, i32
  }
  func.func @transform_1(%arg0: i32, %arg1: i32) -> (i32, i32) {
    %c0_i32 = arith.constant 0 : i32
    %c0_i32_0 = arith.constant 0 : i32
    return %c0_i32, %arg1 : i32, i32
  }
  func.func @transform_2(%arg0: i32, %arg1: i32) -> (i32, i32) {
    %c0_i32 = arith.constant 0 : i32
    %c0_i32_0 = arith.constant 0 : i32
    return %c0_i32, %arg1 : i32, i32
  }
  func.func @transform_3(%arg0: i32, %arg1: i32) -> (i32, i32) {
    %c0_i32 = arith.constant 0 : i32
    %c0_i32_0 = arith.constant 0 : i32
    return %arg1, %c0_i32 : i32, i32
  }
  func.func @transform_4(%arg0: i32, %arg1: i32) -> (i32, i32) {
    %c0_i32 = arith.constant 0 : i32
    %c0_i32_0 = arith.constant 0 : i32
    %c0_i32_1 = arith.constant 0 : i32
    return %c0_i32, %c0_i32_0 : i32, i32
  }
  func.func @transform_5(%arg0: i32, %arg1: i32) -> (i32, i32) {
    %c0_i32 = arith.constant 0 : i32
    %c0_i32_0 = arith.constant 0 : i32
    %c0_i32_1 = arith.constant 0 : i32
    return %c0_i32, %c0_i32_0 : i32, i32
  }
  func.func @transform_6(%arg0: i32, %arg1: i32) -> (i32, i32) {
    %c0_i32 = arith.constant 0 : i32
    %c0_i32_0 = arith.constant 0 : i32
    %c0_i32_1 = arith.constant 0 : i32
    return %c0_i32, %c0_i32_0 : i32, i32
  }
  func.func @transform_7(%arg0: i32, %arg1: i32) -> (i32, i32) {
    %c0_i32 = arith.constant 0 : i32
    %c0_i32_0 = arith.constant 0 : i32
    return %arg0, %c0_i32 : i32, i32
  }
}

</mosaic_0001>

<llo_original>
// kernel: mixer_head_branch_forward.1
$region0: #{mixer_head_branch_forward.1}
  #allocation0 [shape = 'u32[]', space=smem, size = 0x4, offset = 0x4, fixed_abs, tag = 'smem constant byte address 0x4 - core index']
  #allocation1 [shape = 'u32[72,128]{1,0:T(1,128)}', space=vmem, size = 0x9000, scoped, tag = 'internal scratch']
  #allocation2 [shape = 'f32[64,16]{1,0:T(8,128)}', space=vmem, size = 0x8000, scoped, tag = 'scratch operand']
  %s0 = inlined_call_operand.vmem [shape: bf16[64,16], index: 0, kind: input, shape index: {}]
  %s1 = inlined_call_operand.vmem [shape: bf16[16,64], index: 1, kind: input, shape index: {}]
  %s2 = inlined_call_operand.vmem [shape: f32[1,64], index: 2, kind: input, shape index: {}]
  %s3 = inlined_call_operand.vmem [shape: bf16[64,16], index: 3, kind: input, shape index: {}]
  %s4 = inlined_call_operand.vmem [shape: f32[1,16], index: 4, kind: input, shape index: {}]
  %s5 = inlined_call_operand.vmem [shape: bf16[16,128], index: 5, kind: input, shape index: {}]
  %s6 = inlined_call_operand.vmem [shape: f32[1,128], index: 6, kind: input, shape index: {}]
  %s7 = inlined_call_operand.vmem [shape: f32[64,128], index: 7, kind: output, shape index: {}]
  %s8 = sld [smem:[#allocation0]]
  $region46: #{mixer_head_branch_forward.1} parent=0
    _
  %s10 = ssub.s32 1, %s8
  %s11 = scalar_select 0, %s10, %s8
  // Predicated region
  $region2: #{mixer_head_branch_forward.1} parent=0 // pred_check
    _
  $region3: #{mixer_head_branch_forward.1} parent=0 // pred_check_branch
    %13 = sbr.rel (0) target = $region5
  $region4: #{mixer_head_branch_forward.1} parent=0 // pred_region
    _
  $region5: #{mixer_head_branch_forward.1} parent=0 // pred_fallthru
    _
  // Predicated region
  $region6: #{mixer_head_branch_forward.1} parent=0 // pred_check
    _
  $region7: #{mixer_head_branch_forward.1} parent=0 // pred_check_branch
    %15 = sbr.rel (0) target = $region9
  $region8: #{mixer_head_branch_forward.1} parent=0 // pred_region
    _
  $region9: #{mixer_head_branch_forward.1} parent=0 // pred_fallthru
    _
  // Predicated region
  $region10: #{mixer_head_branch_forward.1} parent=0 // pred_check
    _
  $region11: #{mixer_head_branch_forward.1} parent=0 // pred_check_branch
    %17 = sbr.rel (0) target = $region13
  $region12: #{mixer_head_branch_forward.1} parent=0 // pred_region
    _
  $region13: #{mixer_head_branch_forward.1} parent=0 // pred_fallthru
    _
  // Predicated region
  $region14: #{mixer_head_branch_forward.1} parent=0 // pred_check
    _
  $region15: #{mixer_head_branch_forward.1} parent=0 // pred_check_branch
    %19 = sbr.rel (0) target = $region17
  $region16: #{mixer_head_branch_forward.1} parent=0 // pred_region
    _
  $region17: #{mixer_head_branch_forward.1} parent=0 // pred_fallthru
    _
  // Predicated region
  $region18: #{mixer_head_branch_forward.1} parent=0 // pred_check
    _
  $region19: #{mixer_head_branch_forward.1} parent=0 // pred_check_branch
    %21 = sbr.rel (0) target = $region21
  $region20: #{mixer_head_branch_forward.1} parent=0 // pred_region
    _
  $region21: #{mixer_head_branch_forward.1} parent=0 // pred_fallthru
    _
  // Predicated region
  $region22: #{mixer_head_branch_forward.1} parent=0 // pred_check
    _
  $region23: #{mixer_head_branch_forward.1} parent=0 // pred_check_branch
    %23 = sbr.rel (0) target = $region25
  $region24: #{mixer_head_branch_forward.1} parent=0 // pred_region
    _
  $region25: #{mixer_head_branch_forward.1} parent=0 // pred_fallthru
    _
  // Predicated region
  $region26: #{mixer_head_branch_forward.1} parent=0 // pred_check
    _
  $region27: #{mixer_head_branch_forward.1} parent=0 // pred_check_branch
    %25 = sbr.rel (0) target = $region29
  $region28: #{mixer_head_branch_forward.1} parent=0 // pred_region
    _
  $region29: #{mixer_head_branch_forward.1} parent=0 // pred_fallthru
    _
  %p27 = scmp.eq.s32.totalorder 0, 0
  // Predicated region
  $region30: #{mixer_head_branch_forward.1} parent=0 // pred_check
    %p28 = pneg %p27
  $region31: #{mixer_head_branch_forward.1} parent=0 // pred_check_branch
    %30 = sbr.rel (%p28) target = $region33
  $region32: #{mixer_head_branch_forward.1} parent=0 // pred_region
    %vm31 = vcmask 130048
    %32 = vst.msk [vmem:[#allocation2] sm:$0xff] %vm31, 0.0
    %33 = vst.msk [vmem:[#allocation2 + $0x8] sm:$0xff] %vm31, 0.0
    %34 = vst.msk [vmem:[#allocation2 + $0x10] sm:$0xff] %vm31, 0.0
    %35 = vst.msk [vmem:[#allocation2 + $0x18] sm:$0xff] %vm31, 0.0
    %36 = vst.msk [vmem:[#allocation2 + $0x20] sm:$0xff] %vm31, 0.0
    %37 = vst.msk [vmem:[#allocation2 + $0x28] sm:$0xff] %vm31, 0.0
    %38 = vst.msk [vmem:[#allocation2 + $0x30] sm:$0xff] %vm31, 0.0
    %39 = vst.msk [vmem:[#allocation2 + $0x38] sm:$0xff] %vm31, 0.0
  $region33: #{mixer_head_branch_forward.1} parent=0 // pred_fallthru
    _
  %v40 = vld [vmem:[%s0] sm:$0xf]
  %v41 = vld [vmem:[%s0 + $0x4] sm:$0xf]
  %v42 = vld [vmem:[%s0 + $0x8] sm:$0xf]
  %v43 = vld [vmem:[%s0 + $0xc] sm:$0xf]
  %v44 = vld [vmem:[%s0 + $0x10] sm:$0xf]
  %v45 = vld [vmem:[%s0 + $0x14] sm:$0xf]
  %v46 = vld [vmem:[%s0 + $0x18] sm:$0xf]
  %v47 = vld [vmem:[%s0 + $0x1c] sm:$0xf]
  %v48 = vld [vmem:[%s1] sm:$0xf]
  %v49 = vld [vmem:[%s1 + $0x4] sm:$0xf]
  %v50 = vld [vmem:[%s2] sm:$0x1]
  %v52 = vperm.slane %v50, 0
  %v62 = vunpack.c.l.b16 %v40
  %v63 = vunpack.c.l.b16 %v41
  %v64 = vunpack.c.l.b16 %v42
  %v65 = vunpack.c.l.b16 %v43
  %v66 = vunpack.c.l.b16 %v44
  %v67 = vunpack.c.l.b16 %v45
  %v68 = vunpack.c.l.b16 %v46
  %v69 = vunpack.c.l.b16 %v47
  %v70 = vpack.c.b16 %v63, %v62
  %v71 = vpack.c.b16 %v65, %v64
  %v72 = vpack.c.b16 %v67, %v66
  %v73 = vpack.c.b16 %v69, %v68
  %v76 = vunpack.c.l.b16 %v48
  %v77 = vunpack.c.l.b16 %v49
  %v78 = vpack.c.b16 %v77, %v76
  %vm80 = vcmask 130048
  %v82 = vsel %vm80, %v70, 0
  %v85 = vsel %vm80, %v71, 0
  %v88 = vsel %vm80, %v72, 0
  %v91 = vsel %vm80, %v73, 0
  %93 = vmatpush.bf16.msra.mxu0 0
  %94 = vmatpush.bf16.msra.mxu0 0
  %95 = vmatpush.bf16.msra.mxu0 0
  %96 = vmatpush.bf16.msra.mxu0 0
  %97 = vmatpush.bf16.msra.mxu0 0
  %98 = vmatpush.bf16.msra.mxu0 0
  %99 = vmatpush.bf16.msra.mxu0 0
  %100 = vmatpush.bf16.msra.mxu0 %v78
  %101 = vmatmul.bf16.gmra.mxu0 %v82
  %v102 = vpop.f32.mrf.mxu0
  %v103 = vadd.f32 %v52, %v102
  %v104 = vpop.f32.mrf.mxu0
  %v105 = vadd.f32 %v52, %v104
  %106 = vmatmul.bf16.gmra.mxu0 %v85
  %v107 = vpop.f32.mrf.mxu0
  %v108 = vadd.f32 %v52, %v107
  %v109 = vpop.f32.mrf.mxu0
  %v110 = vadd.f32 %v52, %v109
  %111 = vmatmul.bf16.gmra.mxu0 %v88
  %v112 = vpop.f32.mrf.mxu0
  %v113 = vadd.f32 %v52, %v112
  %v114 = vpop.f32.mrf.mxu0
  %v115 = vadd.f32 %v52, %v114
  %116 = vmatmul.bf16.gmra.mxu0 %v91
  %v117 = vpop.f32.mrf.mxu0
  %v118 = vadd.f32 %v52, %v117
  %v119 = vpop.f32.mrf.mxu0
  %v120 = vadd.f32 %v52, %v119
  %121 = vdwg.mxu0
  %v122 = vmul.f32 %v103, 0.5
  %v123 = vmul.f32 %v105, 0.5
  %v124 = vmul.f32 %v108, 0.5
  %v125 = vmul.f32 %v110, 0.5
  %v126 = vmul.f32 %v113, 0.5
  %v127 = vmul.f32 %v115, 0.5
  %v128 = vmul.f32 %v118, 0.5
  %v129 = vmul.f32 %v120, 0.5
  %v130 = vmul.f32 %v103, 0.70710677
  %v131 = vmul.f32 %v105, 0.70710677
  %v132 = vmul.f32 %v108, 0.70710677
  %v133 = vmul.f32 %v110, 0.70710677
  %v134 = vmul.f32 %v113, 0.70710677
  %v135 = vmul.f32 %v115, 0.70710677
  %v136 = vmul.f32 %v118, 0.70710677
  %v137 = vmul.f32 %v120, 0.70710677
  %v138 = vmul.f32 %v130, %v130
  %v139 = vmin.f32 16.0, %v138
  %v140 = vmul.f32 %v139, 2.1237322e-06
  %v141 = vadd.f32 %v140, 0.00028619796
  %v142 = vmul.f32 %v139, %v141
  %v143 = vadd.f32 %v142, 0.0036580483
  %v144 = vmul.f32 %v139, %v143
  %v145 = vadd.f32 %v144, 0.05243302
  %v146 = vmul.f32 %v139, %v145
  %v147 = vadd.f32 %v146, 0.18741608
  %v148 = vmul.f32 %v139, %v147
  %v149 = vadd.f32 %v148, 1.1283791
  %v150 = vmul.f32 %v130, %v149
  %v151 = vmul.f32 %v139, 3.8918573e-05
  %v152 = vadd.f32 %v151, 0.001143296
  %v153 = vmul.f32 %v139, %v152
  %v154 = vadd.f32 %v153, 0.014752088
  %v155 = vmul.f32 %v139, %v154
  %v156 = vadd.f32 %v155, 0.112945676
  %v157 = vmul.f32 %v139, %v156
  %v158 = vadd.f32 %v157, 0.4994258
  %v159 = vmul.f32 %v139, %v158
  %v160 = vadd.f32 %v159, 1.0
  %v161 = vrcp.pop %v160
  %v162 = vmul.f32 %v160, %v161
  %v163 = vsub.f32 1.0, %v162
  %v164 = vmul.f32 %v161, %v163
  %v165 = vadd.f32 %v161, %v164
  %vm166 = vweird.f32 %v160
  %vm167 = vweird.f32 %v161
  %vm168 = vmor %vm166, %vm167
  %v169 = vsel %vm168, %v161, %v165
  %v170 = vand.u32 2147483647, %v160
  %vm171 = vcmp.eq.f32.partialorder %v170, 8.507059e+37
  %v172 = vand.u32 %v160, 2147483648
  %v173 = vor.u32 1.1754944e-38, %v172
  %v174 = vsel %vm171, %v173, %v169
  %v175 = vmul.f32 %v150, %v174
  %v176 = vmin.f32 %v175, 1.0
  %v177 = vmax.f32 %v176, -1.0
  %v178 = vmul.f32 %v131, %v131
  %v179 = vmin.f32 16.0, %v178
  %v180 = vmul.f32 %v179, 2.1237322e-06
  %v181 = vadd.f32 %v180, 0.00028619796
  %v182 = vmul.f32 %v179, %v181
  %v183 = vadd.f32 %v182, 0.0036580483
  %v184 = vmul.f32 %v179, %v183
  %v185 = vadd.f32 %v184, 0.05243302
  %v186 = vmul.f32 %v179, %v185
  %v187 = vadd.f32 %v186, 0.18741608
  %v188 = vmul.f32 %v179, %v187
  %v189 = vadd.f32 %v188, 1.1283791
  %v190 = vmul.f32 %v131, %v189
  %v191 = vmul.f32 %v179, 3.8918573e-05
  %v192 = vadd.f32 %v191, 0.001143296
  %v193 = vmul.f32 %v179, %v192
  %v194 = vadd.f32 %v193, 0.014752088
  %v195 = vmul.f32 %v179, %v194
  %v196 = vadd.f32 %v195, 0.112945676
  %v197 = vmul.f32 %v179, %v196
  %v198 = vadd.f32 %v197, 0.4994258
  %v199 = vmul.f32 %v179, %v198
  %v200 = vadd.f32 %v199, 1.0
  %v201 = vrcp.pop %v200
  %v202 = vmul.f32 %v200, %v201
  %v203 = vsub.f32 1.0, %v202
  %v204 = vmul.f32 %v201, %v203
  %v205 = vadd.f32 %v201, %v204
  %vm206 = vweird.f32 %v200
  %vm207 = vweird.f32 %v201
  %vm208 = vmor %vm206, %vm207
  %v209 = vsel %vm208, %v201, %v205
  %v210 = vand.u32 2147483647, %v200
  %vm211 = vcmp.eq.f32.partialorder %v210, 8.507059e+37
  %v212 = vand.u32 %v200, 2147483648
  %v213 = vor.u32 1.1754944e-38, %v212
  %v214 = vsel %vm211, %v213, %v209
  %v215 = vmul.f32 %v190, %v214
  %v216 = vmin.f32 %v215, 1.0
  %v217 = vmax.f32 %v216, -1.0
  %v218 = vmul.f32 %v132, %v132
  %v219 = vmin.f32 16.0, %v218
  %v220 = vmul.f32 %v219, 2.1237322e-06
  %v221 = vadd.f32 %v220, 0.00028619796
  %v222 = vmul.f32 %v219, %v221
  %v223 = vadd.f32 %v222, 0.0036580483
  %v224 = vmul.f32 %v219, %v223
  %v225 = vadd.f32 %v224, 0.05243302
  %v226 = vmul.f32 %v219, %v225
  %v227 = vadd.f32 %v226, 0.18741608
  %v228 = vmul.f32 %v219, %v227
  %v229 = vadd.f32 %v228, 1.1283791
  %v230 = vmul.f32 %v132, %v229
  %v231 = vmul.f32 %v219, 3.8918573e-05
  %v232 = vadd.f32 %v231, 0.001143296
  %v233 = vmul.f32 %v219, %v232
  %v234 = vadd.f32 %v233, 0.014752088
  %v235 = vmul.f32 %v219, %v234
  %v236 = vadd.f32 %v235, 0.112945676
  %v237 = vmul.f32 %v219, %v236
  %v238 = vadd.f32 %v237, 0.4994258
  %v239 = vmul.f32 %v219, %v238
  %v240 = vadd.f32 %v239, 1.0
  %v241 = vrcp.pop %v240
  %v242 = vmul.f32 %v240, %v241
  %v243 = vsub.f32 1.0, %v242
  %v244 = vmul.f32 %v241, %v243
  %v245 = vadd.f32 %v241, %v244
  %vm246 = vweird.f32 %v240
  %vm247 = vweird.f32 %v241
  %vm248 = vmor %vm246, %vm247
  %v249 = vsel %vm248, %v241, %v245
  %v250 = vand.u32 2147483647, %v240
  %vm251 = vcmp.eq.f32.partialorder %v250, 8.507059e+37
  %v252 = vand.u32 %v240, 2147483648
  %v253 = vor.u32 1.1754944e-38, %v252
  %v254 = vsel %vm251, %v253, %v249
  %v255 = vmul.f32 %v230, %v254
  %v256 = vmin.f32 %v255, 1.0
  %v257 = vmax.f32 %v256, -1.0
  %v258 = vmul.f32 %v133, %v133
  %v259 = vmin.f32 16.0, %v258
  %v260 = vmul.f32 %v259, 2.1237322e-06
  %v261 = vadd.f32 %v260, 0.00028619796
  %v262 = vmul.f32 %v259, %v261
  %v263 = vadd.f32 %v262, 0.0036580483
  %v264 = vmul.f32 %v259, %v263
  %v265 = vadd.f32 %v264, 0.05243302
  %v266 = vmul.f32 %v259, %v265
  %v267 = vadd.f32 %v266, 0.18741608
  %v268 = vmul.f32 %v259, %v267
  %v269 = vadd.f32 %v268, 1.1283791
  %v270 = vmul.f32 %v133, %v269
  %v271 = vmul.f32 %v259, 3.8918573e-05
  %v272 = vadd.f32 %v271, 0.001143296
  %v273 = vmul.f32 %v259, %v272
  %v274 = vadd.f32 %v273, 0.014752088
  %v275 = vmul.f32 %v259, %v274
  %v276 = vadd.f32 %v275, 0.112945676
  %v277 = vmul.f32 %v259, %v276
  %v278 = vadd.f32 %v277, 0.4994258
  %v279 = vmul.f32 %v259, %v278
  %v280 = vadd.f32 %v279, 1.0
  %v281 = vrcp.pop %v280
  %v282 = vmul.f32 %v280, %v281
  %v283 = vsub.f32 1.0, %v282
  %v284 = vmul.f32 %v281, %v283
  %v285 = vadd.f32 %v281, %v284
  %vm286 = vweird.f32 %v280
  %vm287 = vweird.f32 %v281
  %vm288 = vmor %vm286, %vm287
  %v289 = vsel %vm288, %v281, %v285
  %v290 = vand.u32 2147483647, %v280
  %vm291 = vcmp.eq.f32.partialorder %v290, 8.507059e+37
  %v292 = vand.u32 %v280, 2147483648
  %v293 = vor.u32 1.1754944e-38, %v292
  %v294 = vsel %vm291, %v293, %v289
  %v295 = vmul.f32 %v270, %v294
  %v296 = vmin.f32 %v295, 1.0
  %v297 = vmax.f32 %v296, -1.0
  %v298 = vmul.f32 %v134, %v134
  %v299 = vmin.f32 16.0, %v298
  %v300 = vmul.f32 %v299, 2.1237322e-06
  %v301 = vadd.f32 %v300, 0.00028619796
  %v302 = vmul.f32 %v299, %v301
  %v303 = vadd.f32 %v302, 0.0036580483
  %v304 = vmul.f32 %v299, %v303
  %v305 = vadd.f32 %v304, 0.05243302
  %v306 = vmul.f32 %v299, %v305
  %v307 = vadd.f32 %v306, 0.18741608
  %v308 = vmul.f32 %v299, %v307
  %v309 = vadd.f32 %v308, 1.1283791
  %v310 = vmul.f32 %v134, %v309
  %v311 = vmul.f32 %v299, 3.8918573e-05
  %v312 = vadd.f32 %v311, 0.001143296
  %v313 = vmul.f32 %v299, %v312
  %v314 = vadd.f32 %v313, 0.014752088
  %v315 = vmul.f32 %v299, %v314
  %v316 = vadd.f32 %v315, 0.112945676
  %v317 = vmul.f32 %v299, %v316
  %v318 = vadd.f32 %v317, 0.4994258
  %v319 = vmul.f32 %v299, %v318
  %v320 = vadd.f32 %v319, 1.0
  %v321 = vrcp.pop %v320
  %v322 = vmul.f32 %v320, %v321
  %v323 = vsub.f32 1.0, %v322
  %v324 = vmul.f32 %v321, %v323
  %v325 = vadd.f32 %v321, %v324
  %vm326 = vweird.f32 %v320
  %vm327 = vweird.f32 %v321
  %vm328 = vmor %vm326, %vm327
  %v329 = vsel %vm328, %v321, %v325
  %v330 = vand.u32 2147483647, %v320
  %vm331 = vcmp.eq.f32.partialorder %v330, 8.507059e+37
  %v332 = vand.u32 %v320, 2147483648
  %v333 = vor.u32 1.1754944e-38, %v332
  %v334 = vsel %vm331, %v333, %v329
  %v335 = vmul.f32 %v310, %v334
  %v336 = vmin.f32 %v335, 1.0
  %v337 = vmax.f32 %v336, -1.0
  %v338 = vmul.f32 %v135, %v135
  %v339 = vmin.f32 16.0, %v338
  %v340 = vmul.f32 %v339, 2.1237322e-06
  %v341 = vadd.f32 %v340, 0.00028619796
  %v342 = vmul.f32 %v339, %v341
  %v343 = vadd.f32 %v342, 0.0036580483
  %v344 = vmul.f32 %v339, %v343
  %v345 = vadd.f32 %v344, 0.05243302
  %v346 = vmul.f32 %v339, %v345
  %v347 = vadd.f32 %v346, 0.18741608
  %v348 = vmul.f32 %v339, %v347
  %v349 = vadd.f32 %v348, 1.1283791
  %v350 = vmul.f32 %v135, %v349
  %v351 = vmul.f32 %v339, 3.8918573e-05
  %v352 = vadd.f32 %v351, 0.001143296
  %v353 = vmul.f32 %v339, %v352
  %v354 = vadd.f32 %v353, 0.014752088
  %v355 = vmul.f32 %v339, %v354
  %v356 = vadd.f32 %v355, 0.112945676
  %v357 = vmul.f32 %v339, %v356
  %v358 = vadd.f32 %v357, 0.4994258
  %v359 = vmul.f32 %v339, %v358
  %v360 = vadd.f32 %v359, 1.0
  %v361 = vrcp.pop %v360
  %v362 = vmul.f32 %v360, %v361
  %v363 = vsub.f32 1.0, %v362
  %v364 = vmul.f32 %v361, %v363
  %v365 = vadd.f32 %v361, %v364
  %vm366 = vweird.f32 %v360
  %vm367 = vweird.f32 %v361
  %vm368 = vmor %vm366, %vm367
  %v369 = vsel %vm368, %v361, %v365
  %v370 = vand.u32 2147483647, %v360
  %vm371 = vcmp.eq.f32.partialorder %v370, 8.507059e+37
  %v372 = vand.u32 %v360, 2147483648
  %v373 = vor.u32 1.1754944e-38, %v372
  %v374 = vsel %vm371, %v373, %v369
  %v375 = vmul.f32 %v350, %v374
  %v376 = vmin.f32 %v375, 1.0
  %v377 = vmax.f32 %v376, -1.0
  %v378 = vmul.f32 %v136, %v136
  %v379 = vmin.f32 16.0, %v378
  %v380 = vmul.f32 %v379, 2.1237322e-06
  %v381 = vadd.f32 %v380, 0.00028619796
  %v382 = vmul.f32 %v379, %v381
  %v383 = vadd.f32 %v382, 0.0036580483
  %v384 = vmul.f32 %v379, %v383
  %v385 = vadd.f32 %v384, 0.05243302
  %v386 = vmul.f32 %v379, %v385
  %v387 = vadd.f32 %v386, 0.18741608
  %v388 = vmul.f32 %v379, %v387
  %v389 = vadd.f32 %v388, 1.1283791
  %v390 = vmul.f32 %v136, %v389
  %v391 = vmul.f32 %v379, 3.8918573e-05
  %v392 = vadd.f32 %v391, 0.001143296
  %v393 = vmul.f32 %v379, %v392
  %v394 = vadd.f32 %v393, 0.014752088
  %v395 = vmul.f32 %v379, %v394
  %v396 = vadd.f32 %v395, 0.112945676
  %v397 = vmul.f32 %v379, %v396
  %v398 = vadd.f32 %v397, 0.4994258
  %v399 = vmul.f32 %v379, %v398
  %v400 = vadd.f32 %v399, 1.0
  %v401 = vrcp.pop %v400
  %v402 = vmul.f32 %v400, %v401
  %v403 = vsub.f32 1.0, %v402
  %v404 = vmul.f32 %v401, %v403
  %v405 = vadd.f32 %v401, %v404
  %vm406 = vweird.f32 %v400
  %vm407 = vweird.f32 %v401
  %vm408 = vmor %vm406, %vm407
  %v409 = vsel %vm408, %v401, %v405
  %v410 = vand.u32 2147483647, %v400
  %vm411 = vcmp.eq.f32.partialorder %v410, 8.507059e+37
  %v412 = vand.u32 %v400, 2147483648
  %v413 = vor.u32 1.1754944e-38, %v412
  %v414 = vsel %vm411, %v413, %v409
  %v415 = vmul.f32 %v390, %v414
  %v416 = vmin.f32 %v415, 1.0
  %v417 = vmax.f32 %v416, -1.0
  %v418 = vmul.f32 %v137, %v137
  %v419 = vmin.f32 16.0, %v418
  %v420 = vmul.f32 %v419, 2.1237322e-06
  %v421 = vadd.f32 %v420, 0.00028619796
  %v422 = vmul.f32 %v419, %v421
  %v423 = vadd.f32 %v422, 0.0036580483
  %v424 = vmul.f32 %v419, %v423
  %v425 = vadd.f32 %v424, 0.05243302
  %v426 = vmul.f32 %v419, %v425
  %v427 = vadd.f32 %v426, 0.18741608
  %v428 = vmul.f32 %v419, %v427
  %v429 = vadd.f32 %v428, 1.1283791
  %v430 = vmul.f32 %v137, %v429
  %v431 = vmul.f32 %v419, 3.8918573e-05
  %v432 = vadd.f32 %v431, 0.001143296
  %v433 = vmul.f32 %v419, %v432
  %v434 = vadd.f32 %v433, 0.014752088
  %v435 = vmul.f32 %v419, %v434
  %v436 = vadd.f32 %v435, 0.112945676
  %v437 = vmul.f32 %v419, %v436
  %v438 = vadd.f32 %v437, 0.4994258
  %v439 = vmul.f32 %v419, %v438
  %v440 = vadd.f32 %v439, 1.0
  %v441 = vrcp.pop %v440
  %v442 = vmul.f32 %v440, %v441
  %v443 = vsub.f32 1.0, %v442
  %v444 = vmul.f32 %v441, %v443
  %v445 = vadd.f32 %v441, %v444
  %vm446 = vweird.f32 %v440
  %vm447 = vweird.f32 %v441
  %vm448 = vmor %vm446, %vm447
  %v449 = vsel %vm448, %v441, %v445
  %v450 = vand.u32 2147483647, %v440
  %vm451 = vcmp.eq.f32.partialorder %v450, 8.507059e+37
  %v452 = vand.u32 %v440, 2147483648
  %v453 = vor.u32 1.1754944e-38, %v452
  %v454 = vsel %vm451, %v453, %v449
  %v455 = vmul.f32 %v430, %v454
  %v456 = vmin.f32 %v455, 1.0
  %v457 = vmax.f32 %v456, -1.0
  %v458 = vadd.f32 %v177, 1.0
  %v459 = vadd.f32 %v217, 1.0
  %v460 = vadd.f32 %v257, 1.0
  %v461 = vadd.f32 %v297, 1.0
  %v462 = vadd.f32 %v337, 1.0
  %v463 = vadd.f32 %v377, 1.0
  %v464 = vadd.f32 %v417, 1.0
  %v465 = vadd.f32 %v457, 1.0
  %v466 = vmul.f32 %v122, %v458
  %v467 = vmul.f32 %v123, %v459
  %v468 = vmul.f32 %v124, %v460
  %v469 = vmul.f32 %v125, %v461
  %v470 = vmul.f32 %v126, %v462
  %v471 = vmul.f32 %v127, %v463
  %v472 = vmul.f32 %v128, %v464
  %v473 = vmul.f32 %v129, %v465
  %v474 = vld [vmem:[#allocation2] sm:$0xff]
  %v475 = vld [vmem:[#allocation2 + $0x8] sm:$0xff]
  %v476 = vld [vmem:[#allocation2 + $0x10] sm:$0xff]
  %v477 = vld [vmem:[#allocation2 + $0x18] sm:$0xff]
  %v478 = vld [vmem:[#allocation2 + $0x20] sm:$0xff]
  %v479 = vld [vmem:[#allocation2 + $0x28] sm:$0xff]
  %v480 = vld [vmem:[#allocation2 + $0x30] sm:$0xff]
  %v481 = vld [vmem:[#allocation2 + $0x38] sm:$0xff]
  %v482 = vpack.c.bf16 %v467, %v466
  %v483 = vpack.c.bf16 %v469, %v468
  %v484 = vpack.c.bf16 %v471, %v470
  %v485 = vpack.c.bf16 %v473, %v472
  %v486 = vld [vmem:[%s3] sm:$0xf]
  %v487 = vld [vmem:[%s3 + $0x4] sm:$0xf]
  %v488 = vld [vmem:[%s3 + $0x8] sm:$0xf]
  %v489 = vld [vmem:[%s3 + $0xc] sm:$0xf]
  %v490 = vld [vmem:[%s3 + $0x10] sm:$0xf]
  %v491 = vld [vmem:[%s3 + $0x14] sm:$0xf]
  %v492 = vld [vmem:[%s3 + $0x18] sm:$0xf]
  %v493 = vld [vmem:[%s3 + $0x1c] sm:$0xf]
  %v502 = vunpack.c.l.b16 %v486
  %v503 = vunpack.c.l.b16 %v487
  %v504 = vunpack.c.l.b16 %v488
  %v505 = vunpack.c.l.b16 %v489
  %v506 = vunpack.c.l.b16 %v490
  %v507 = vunpack.c.l.b16 %v491
  %v508 = vunpack.c.l.b16 %v492
  %v509 = vunpack.c.l.b16 %v493
  %v510 = vpack.c.b16 %v503, %v502
  %v511 = vpack.c.b16 %v505, %v504
  %v512 = vpack.c.b16 %v507, %v506
  %v513 = vpack.c.b16 %v509, %v508
  %vm518 = vcmask 523264
  %v520 = vsel %vm518, %v482, 0
  %v523 = vsel %vm518, %v483, 0
  %v526 = vsel %vm518, %v484, 0
  %v529 = vsel %vm518, %v485, 0
  %531 = vmatpush.bf16.msra.mxu0 0
  %532 = vmatpush.bf16.msra.mxu0 0
  %533 = vmatpush.bf16.msra.mxu0 0
  %534 = vmatpush.bf16.msra.mxu0 0
  %535 = vmatpush.bf16.msra.mxu0 %v513
  %536 = vmatpush.bf16.msra.mxu0 %v512
  %537 = vmatpush.bf16.msra.mxu0 %v511
  %538 = vmatpush.bf16.msra.mxu0 %v510
  %539 = vmatmul.bf16.gmra.mxu0 %v520
  %v540 = vpop.f32.mrf.mxu0
  %v541 = vadd.f32 0.0, %v540
  %v542 = vpop.f32.mrf.mxu0
  %v543 = vadd.f32 0.0, %v542
  %544 = vmatmul.bf16.gmra.mxu0 %v523
  %v545 = vpop.f32.mrf.mxu0
  %v546 = vadd.f32 0.0, %v545
  %v547 = vpop.f32.mrf.mxu0
  %v548 = vadd.f32 0.0, %v547
  %549 = vmatmul.bf16.gmra.mxu0 %v526
  %v550 = vpop.f32.mrf.mxu0
  %v551 = vadd.f32 0.0, %v550
  %v552 = vpop.f32.mrf.mxu0
  %v553 = vadd.f32 0.0, %v552
  %554 = vmatmul.bf16.gmra.mxu0 %v529
  %v555 = vpop.f32.mrf.mxu0
  %v556 = vadd.f32 0.0, %v555
  %v557 = vpop.f32.mrf.mxu0
  %v558 = vadd.f32 0.0, %v557
  %559 = vdwg.mxu0
  %v560 = vadd.f32 %v474, %v541
  %v561 = vadd.f32 %v475, %v543
  %v562 = vadd.f32 %v476, %v546
  %v563 = vadd.f32 %v477, %v548
  %v564 = vadd.f32 %v478, %v551
  %v565 = vadd.f32 %v479, %v553
  %v566 = vadd.f32 %v480, %v556
  %v567 = vadd.f32 %v481, %v558
  %568 = vst.msk [vmem:[#allocation2] sm:$0xff] %vm80, %v560
  %569 = vst.msk [vmem:[#allocation2 + $0x8] sm:$0xff] %vm80, %v561
  %570 = vst.msk [vmem:[#allocation2 + $0x10] sm:$0xff] %vm80, %v562
  %571 = vst.msk [vmem:[#allocation2 + $0x18] sm:$0xff] %vm80, %v563
  %572 = vst.msk [vmem:[#allocation2 + $0x20] sm:$0xff] %vm80, %v564
  %573 = vst.msk [vmem:[#allocation2 + $0x28] sm:$0xff] %vm80, %v565
  %574 = vst.msk [vmem:[#allocation2 + $0x30] sm:$0xff] %vm80, %v566
  %575 = vst.msk [vmem:[#allocation2 + $0x38] sm:$0xff] %vm80, %v567
  // Predicated region
  $region34: #{mixer_head_branch_forward.1} parent=0 // pred_check
    %p576 = pneg %p27
  $region35: #{mixer_head_branch_forward.1} parent=0 // pred_check_branch
    %578 = sbr.rel (%p576) target = $region37
  $region36: #{mixer_head_branch_forward.1} parent=0 // pred_region
    %v579 = vld [vmem:[#allocation2] sm:$0xff]
    %v580 = vld [vmem:[#allocation2 + $0x8] sm:$0xff]
    %v581 = vld [vmem:[#allocation2 + $0x10] sm:$0xff]
    %v582 = vld [vmem:[#allocation2 + $0x18] sm:$0xff]
    %v583 = vld [vmem:[#allocation2 + $0x20] sm:$0xff]
    %v584 = vld [vmem:[#allocation2 + $0x28] sm:$0xff]
    %v585 = vld [vmem:[#allocation2 + $0x30] sm:$0xff]
    %v586 = vld [vmem:[#allocation2 + $0x38] sm:$0xff]
    %v587 = vld [vmem:[%s4] sm:$0x1]
    %v589 = vperm.slane %v587, 0
    %v591 = vadd.f32 %v579, %v589
    %v592 = vadd.f32 %v580, %v589
    %v593 = vadd.f32 %v581, %v589
    %v594 = vadd.f32 %v582, %v589
    %v595 = vadd.f32 %v583, %v589
    %v596 = vadd.f32 %v584, %v589
    %v597 = vadd.f32 %v585, %v589
    %v598 = vadd.f32 %v586, %v589
    %v599 = vpack.c.bf16 %v592, %v591
    %v600 = vpack.c.bf16 %v594, %v593
    %v601 = vpack.c.bf16 %v596, %v595
    %v602 = vpack.c.bf16 %v598, %v597
    %v603 = vld [vmem:[%s5] sm:$0xf]
    %v604 = vld [vmem:[%s5 + $0x4] sm:$0xf]
    %v605 = vld [vmem:[%s6] sm:$0x1]
    %v607 = vperm.slane %v605, 0
    %v611 = vunpack.c.l.b16 %v603
    %v612 = vunpack.c.l.b16 %v604
    %v613 = vpack.c.b16 %v612, %v611
    %v616 = vsel %vm80, %v599, 0
    %v619 = vsel %vm80, %v600, 0
    %v622 = vsel %vm80, %v601, 0
    %v625 = vsel %vm80, %v602, 0
    %627 = vmatpush.bf16.msra.mxu0 0
    %628 = vmatpush.bf16.msra.mxu0 0
    %629 = vmatpush.bf16.msra.mxu0 0
    %630 = vmatpush.bf16.msra.mxu0 0
    %631 = vmatpush.bf16.msra.mxu0 0
    %632 = vmatpush.bf16.msra.mxu0 0
    %633 = vmatpush.bf16.msra.mxu0 0
    %634 = vmatpush.bf16.msra.mxu0 %v613
    %635 = vmatmul.bf16.gmra.mxu0 %v616
    %v636 = vpop.f32.mrf.mxu0
    %v637 = vadd.f32 %v607, %v636
    %v638 = vpop.f32.mrf.mxu0
    %v639 = vadd.f32 %v607, %v638
    %640 = vmatmul.bf16.gmra.mxu0 %v619
    %v641 = vpop.f32.mrf.mxu0
    %v642 = vadd.f32 %v607, %v641
    %v643 = vpop.f32.mrf.mxu0
    %v644 = vadd.f32 %v607, %v643
    %645 = vmatmul.bf16.gmra.mxu0 %v622
    %v646 = vpop.f32.mrf.mxu0
    %v647 = vadd.f32 %v607, %v646
    %v648 = vpop.f32.mrf.mxu0
    %v649 = vadd.f32 %v607, %v648
    %650 = vmatmul.bf16.gmra.mxu0 %v625
    %v651 = vpop.f32.mrf.mxu0
    %v652 = vadd.f32 %v607, %v651
    %v653 = vpop.f32.mrf.mxu0
    %v654 = vadd.f32 %v607, %v653
    %655 = vdwg.mxu0
    %656 = vst [vmem:[%s7] sm:$0xff] %v637
    %657 = vst [vmem:[%s7 + $0x8] sm:$0xff] %v639
    %658 = vst [vmem:[%s7 + $0x10] sm:$0xff] %v642
    %659 = vst [vmem:[%s7 + $0x18] sm:$0xff] %v644
    %660 = vst [vmem:[%s7 + $0x20] sm:$0xff] %v647
    %661 = vst [vmem:[%s7 + $0x28] sm:$0xff] %v649
    %662 = vst [vmem:[%s7 + $0x30] sm:$0xff] %v652
    %663 = vst [vmem:[%s7 + $0x38] sm:$0xff] %v654
  $region37: #{mixer_head_branch_forward.1} parent=0 // pred_fallthru
    _
  // Predicated region
  $region38: #{mixer_head_branch_forward.1} parent=0 // pred_check
    _
  $region39: #{mixer_head_branch_forward.1} parent=0 // pred_check_branch
    %665 = sbr.rel (0) target = $region41
  $region40: #{mixer_head_branch_forward.1} parent=0 // pred_region
    _
  $region41: #{mixer_head_branch_forward.1} parent=0 // pred_fallthru
    _
  // Predicated region
  $region42: #{mixer_head_branch_forward.1} parent=0 // pred_check
    _
  $region43: #{mixer_head_branch_forward.1} parent=0 // pred_check_branch
    %667 = sbr.rel (0) target = $region45
  $region44: #{mixer_head_branch_forward.1} parent=0 // pred_region
    _
  $region45: #{mixer_head_branch_forward.1} parent=0 // pred_fallthru
    _

</llo_original>
